<compile_context>
chip_gen: v6e
topology: v6e:2x2x1
jax: 0.10.0
libtpu: 0.0.40
codegen_flags: <defaults>
</compile_context>

<pallas_src>
import jax
import jax.numpy as jnp
from jax.experimental import pallas as pl
from jax.experimental.pallas import tpu as pltpu


def _hbm_copy_kernel(x_ref, o_ref, sem):
    # Whole-tensor HBM -> HBM DMA: start + wait in one invocation.
    cp = pltpu.make_async_copy(x_ref, o_ref, sem)
    cp.start()
    cp.wait()


def _materialized_copy(x: jax.Array) -> jax.Array:
    """Explicit 1R+1W copy of `x` via a single DMA (no grid, no VMEM staging)."""
    return pl.pallas_call(
        _hbm_copy_kernel,
        out_shape=jax.ShapeDtypeStruct(x.shape, x.dtype),
        in_specs=[pl.BlockSpec(memory_space=pl.ANY)],   # raw HBM ref, no auto-DMA
        out_specs=pl.BlockSpec(memory_space=pl.ANY),    # raw HBM ref
        scratch_shapes=[pltpu.SemaphoreType.DMA],
    )(x)


def height_compression(x: jax.Array, *, materialize: bool = False) -> jax.Array:
    """(N, C, D, H, W) -> (N, C*D, H, W), matching torch .view semantics.

    Default path is a metadata-only reshape (zero HBM traffic).  Set
    `materialize=True` to force an explicit copy via a single HBM->HBM DMA
    (e.g. when a freshly materialized buffer is required downstream).
    """
    N, C, D, H, W = x.shape
    y = jnp.reshape(x, (N, C * D, H, W))   # free: merges adjacent leading dims
    if materialize:
        y = _materialized_copy(y)
    return y


class HeightCompression:
    """Parameter-free module; num_bev_features == C * D of the incoming tensor."""

    def __init__(self, num_bev_features: int):
        self.num_bev_features = num_bev_features

    def get_output_feature_dim(self):
        return self.num_bev_features

    def __call__(self, dense_spconv_tensor: jax.Array,
                 materialize: bool = False) -> jax.Array:
        return height_compression(dense_spconv_tensor, materialize=materialize)


if __name__ == "__main__":
    key = jax.random.PRNGKey(0)

    # Small shapes consistent with the forward: N=2, C=4, D=4, H=16, W=16
    N, C, D, H, W = 2, 4, 4, 16, 16
    x = jax.random.normal(key, (N, C, D, H, W), dtype=jnp.float32)
    ref = jnp.reshape(x, (N, C * D, H, W))

    module = HeightCompression(num_bev_features=C * D)

    # Default zero-copy path.
    out = jax.block_until_ready(module(x))
    assert out.shape == (N, C * D, H, W)
    assert out.dtype == x.dtype
    assert bool(jnp.array_equal(out, ref))

    # Explicit Pallas kernel path (single HBM->HBM DMA).
    out_mat = jax.block_until_ready(module(x, materialize=True))
    assert out_mat.shape == (N, C * D, H, W)
    assert out_mat.dtype == x.dtype
    assert bool(jnp.array_equal(out_mat, ref))

    # Ragged spatial dims (previously hit the lane-sparse 3-D fallback);
    # the single-DMA path handles them with no layout constraints.
    x2 = jax.random.normal(jax.random.PRNGKey(0), (2, 4, 4, 5, 5),
                           dtype=jnp.float32)
    out2 = jax.block_until_ready(height_compression(x2, materialize=True))
    ref2 = jnp.reshape(x2, (2, 16, 5, 5))
    assert bool(jnp.array_equal(out2, ref2))

    print("KERNEL_OK")
</pallas_src>

<mosaic_0001>
module attributes {stable_mosaic.version = 11 : i64} {
  func.func @_hbm_copy_kernel(%arg0: memref<2x16x16x16xf32, #tpu.memory_space<any>>, %arg1: memref<2x16x16x16xf32, #tpu.memory_space<any>>, %arg2: memref<!tpu.dma_semaphore, #tpu.memory_space<semaphore_mem>>) attributes {dimension_semantics = [], scalar_prefetch = 0 : i64, scratch_operands = 1 : i64, tpu.core_type = #tpu.core_type<tc>} {
    tpu.enqueue_dma source(%arg0 : memref<2x16x16x16xf32, #tpu.memory_space<any>>) target(%arg1 : memref<2x16x16x16xf32, #tpu.memory_space<any>>) target_semaphore(%arg2 : memref<!tpu.dma_semaphore, #tpu.memory_space<semaphore_mem>>)
    tpu.wait_dma2 semaphore(%arg2 : memref<!tpu.dma_semaphore, #tpu.memory_space<semaphore_mem>>) src(%arg0 : memref<2x16x16x16xf32, #tpu.memory_space<any>>) dst(%arg1 : memref<2x16x16x16xf32, #tpu.memory_space<any>>)
    return
  }
}

</mosaic_0001>

<llo_original>
// kernel: tpu_custom_call.1
$region0: #{tpu_custom_call.1}
  #allocation0 [shape = 'u32[]', space=smem, size = 0x4, offset = 0x4, fixed_abs, tag = 'smem constant byte address 0x4 - core index']
  #allocation1 [shape = 'u32[144,128]{1,0:T(1,128)}', space=vmem, size = 0x12000, scoped, tag = 'internal scratch']
  #allocation2 [shape = 's32[1]{0}', space=sflag, size = 0x4, scoped, tag = 'scratch operand']
  #allocation3 [shape = 's32[]', space=sflag, size = 0x4, offset = 0, fixed_abs, tag = 'sflag constant byte address 0x0 - dummy sync flag']
  #allocation4 [shape = 'u32[0]{0}', space=smem, size = 0, offset = 0, fixed_abs, tag = 'smem constant byte address 0x0 - null']
  %s0 = inlined_call_operand.hbm [shape: f32[2,16,16,16], index: 0, kind: input, shape index: {}]
  %s1 = inlined_call_operand.hbm [shape: f32[2,16,16,16], index: 1, kind: output, shape index: {}]
  %s2 = sld [smem:[#allocation0]]
  $region2: #{tpu_custom_call.1} parent=0
    _
  %s4 = ssub.s32 1, %s2
  %s5 = scalar_select 0, %s4, %s2
  %s7 = sshll.u32 1, 14
  %s8 = sxor.u32 4294967295, %s7
  %12 = dma.general %s0, 8192, %s1, [#allocation2], 131072, [#allocation4], 0, 0
  %s13 = smul.u32 2, 16
  %s14 = smul.u32 %s13, 16
  %s15 = smul.u32 %s14, 1
  %s16 = sshll.u32 %s15, 4
  %17 = dma.done [#allocation2], %s16
  %18 = vsyncmov [#allocation2]
  %s19 = vpop.sfrf %18
  %p20 = scmp.eq.s32.totalorder %s19, 0
  %p21 = pneg %p20
  %23 = shalt.err (%p21)

</llo_original>
